<compile_context>
chip_gen: v7x
topology: tpu7x:2x2x1
jax: 0.10.0
libtpu: 0.0.40
codegen_flags: <defaults>
</compile_context>

<pallas_src>
import jax
import jax.numpy as jnp
from jax.experimental import pallas as pl
from jax.experimental.pallas import tpu as pltpu


def _round_up(x, m):
    return (x + m - 1) // m * m


# ----------------------------------------------------------------------------
# Kernels
# ----------------------------------------------------------------------------
def _linear_full_k_kernel(x_ref, w_ref, b_ref, o_ref):
    """One (TM, TN) output tile, full-K MXU contraction, f32 bias epilogue."""
    acc = jnp.dot(x_ref[...], w_ref[...], preferred_element_type=jnp.float32)
    o_ref[...] = (acc + b_ref[...].astype(jnp.float32)).astype(o_ref.dtype)


def _linear_blocked_k_kernel(x_ref, w_ref, b_ref, o_ref, acc_ref):
    """Blocked-K contraction with an f32 VMEM accumulator (init/finalize)."""
    k = pl.program_id(2)

    @pl.when(k == 0)
    def _():
        acc_ref[...] = jnp.zeros_like(acc_ref)

    acc_ref[...] += jnp.dot(x_ref[...], w_ref[...],
                            preferred_element_type=jnp.float32)

    @pl.when(k == pl.num_programs(2) - 1)
    def _():
        o_ref[...] = (acc_ref[...]
                      + b_ref[...].astype(jnp.float32)).astype(o_ref.dtype)


# ----------------------------------------------------------------------------
# Generation-aware configuration & tile selection
# ----------------------------------------------------------------------------
def _tpu_config():
    """VMEM tile budget, scoped-VMEM limit and tile caps per TPU generation."""
    kind = ""
    try:
        kind = jax.devices()[0].device_kind.lower()
    except Exception:
        pass
    if "v7" in kind:
        # Only 64 MiB VMEM per TensorCore: never carry over budgets tuned on
        # the 128-MiB generations.
        return {"budget": 36 << 20, "vmem_limit": 48 << 20,
                "tm_cap": 512, "tn_cap": 256}
    if any(tag in kind for tag in ("v5 lite", "v5e", "v6")):
        # 128 MiB physical VMEM; raise the conservative scoped default.
        return {"budget": 80 << 20, "vmem_limit": 100 << 20,
                "tm_cap": 1024, "tn_cap": 512}
    # Unknown generation: stay conservative.
    return {"budget": 24 << 20, "vmem_limit": None,
            "tm_cap": 512, "tn_cap": 256}


def _footprint_bytes(TM, TN, TK, gn, gk, in_itemsize, out_itemsize):
    """Pipelined VMEM footprint: real itemsize, resident weight counted once."""
    w_resident = (gn == 1 and gk == 1)        # revisited block -> single buffer
    w_bufs = 1 if w_resident else 2
    x_b = 2 * TM * TK * in_itemsize           # streamed, double-buffered
    w_b = w_bufs * TK * TN * in_itemsize
    b_b = w_bufs * TN * 4
    o_b = 2 * TM * TN * out_itemsize
    acc_b = TM * TN * 4 if gk > 1 else 0      # f32 scratch accumulator
    return x_b + w_b + b_b + o_b + acc_b


def _choose_tiles(M, D_in, D_out, in_itemsize, out_itemsize, cfg):
    budget, tm_cap, tn_cap = cfg["budget"], cfg["tm_cap"], cfg["tn_cap"]

    # --- TN candidates: full weight residency first, then lane-aligned. -----
    if D_out % 128 == 0:
        tn_cands = [D_out] + [t for t in (512, 256, 128)
                              if t <= tn_cap and t < D_out and D_out % t == 0]
    else:
        # Full-extent (lane-ragged) block is allowed by BlockSpec; gn == 1.
        tn_cands = [D_out]

    # --- TM candidates: biggest first, never exceeding the 8-aligned M. -----
    tm_hi = min(tm_cap, max(8, (M // 8) * 8))
    tm_cands = []
    t = tm_hi
    while t >= 8:
        tm_cands.append(t)
        if t == 8:
            break
        t = max(8, _round_up(t // 2, 8))

    def fits(TM, TN, TK, gn, gk):
        return _footprint_bytes(TM, TN, TK, gn, gk,
                                in_itemsize, out_itemsize) <= budget

    # Pass 1: full-K contraction (no reduction grid axis, no K padding).
    for TN in tn_cands:
        gn = pl.cdiv(D_out, TN)
        for TM in tm_cands:
            if fits(TM, TN, D_in, gn, 1):
                return {"TM": TM, "TN": TN, "TK": D_in, "gk": 1, "pad_k": 0}

    # Pass 2: blocked-K with an f32 accumulator (keeps MXU-shaped row tiles
    # for very large D_in).  K is zero-padded to a multiple of 128 so every K
    # tile is exact -- un-zeroed edge garbage would corrupt every output.
    Kp = _round_up(D_in, 128)
    q = Kp // 128
    tk_cands = sorted({128 * d for d in range(1, q + 1) if q % d == 0},
                      reverse=True)
    for TN in tn_cands:
        gn = pl.cdiv(D_out, TN)
        for TM in tm_cands:
            for TK in tk_cands:
                gk = Kp // TK
                if gk == 1:
                    continue
                if fits(TM, TN, TK, gn, gk):
                    return {"TM": TM, "TN": TN, "TK": TK, "gk": gk,
                            "pad_k": Kp - D_in}
    return None


# ----------------------------------------------------------------------------
# Wrapper
# ----------------------------------------------------------------------------
def _pallas_linear(x2d, w, b, *, mxu_dtype=None):
    """x2d: (M, D_in), w: (D_in, D_out), b: (D_out,) -> (M, D_out)."""
    M, D_in = x2d.shape
    D_out = w.shape[1]
    out_dtype = x2d.dtype

    # Tiny problems: pallas_call launch + per-step overhead loses to XLA's
    # fused matmul.  Threshold kept low so realistic sizes use the kernel.
    if M < 8 or (M * D_in * D_out) < (1 << 14):
        return (jnp.dot(x2d, w) + b).astype(out_dtype)

    if mxu_dtype is not None:
        # Optional reduced-precision MXU operands (accumulation stays f32).
        x2d = x2d.astype(mxu_dtype)
        w = w.astype(mxu_dtype)

    cfg = _tpu_config()
    tiles = _choose_tiles(M, D_in, D_out,
                          x2d.dtype.itemsize, jnp.dtype(out_dtype).itemsize,
                          cfg)
    if tiles is None:
        # TODO(synk): two-level K/N streaming for weights too large for any
        # single-tile configuration; fall back to XLA for now.
        return (jnp.dot(x2d, w) + b).astype(out_dtype)

    TM, TN, TK, gk, pad_k = (tiles["TM"], tiles["TN"], tiles["TK"],
                             tiles["gk"], tiles["pad_k"])
    gm = pl.cdiv(M, TM)
    gn = pl.cdiv(D_out, TN)

    b2 = b.reshape(1, D_out)

    cp_kwargs = {}
    if cfg["vmem_limit"] is not None:
        cp_kwargs["vmem_limit_bytes"] = cfg["vmem_limit"]

    if gk == 1:
        return pl.pallas_call(
            _linear_full_k_kernel,
            out_shape=jax.ShapeDtypeStruct((M, D_out), out_dtype),
            grid_spec=pltpu.PrefetchScalarGridSpec(
                num_scalar_prefetch=0,
                grid=(gm, gn),
                in_specs=[
                    # Activations stream over (possibly ragged) row tiles;
                    # garbage edge rows never land in the output array.
                    pl.BlockSpec((TM, TK), lambda i, j: (i, 0)),
                    # Weight / bias depend only on j; with gn == 1 they stay
                    # resident in VMEM for the whole grid (single DMA).
                    pl.BlockSpec((TK, TN), lambda i, j: (0, j)),
                    pl.BlockSpec((1, TN), lambda i, j: (0, j)),
                ],
                out_specs=pl.BlockSpec((TM, TN), lambda i, j: (i, j)),
            ),
            compiler_params=pltpu.CompilerParams(
                dimension_semantics=("parallel", "parallel"), **cp_kwargs),
        )(x2d, w, b2)

    # Blocked-K path: zero-pad K only (the sole axis where un-zeroed padding
    # corrupts the contraction).
    if pad_k:
        x2d = jnp.pad(x2d, ((0, 0), (0, pad_k)))
        w = jnp.pad(w, ((0, pad_k), (0, 0)))

    return pl.pallas_call(
        _linear_blocked_k_kernel,
        out_shape=jax.ShapeDtypeStruct((M, D_out), out_dtype),
        grid_spec=pltpu.PrefetchScalarGridSpec(
            num_scalar_prefetch=0,
            grid=(gm, gn, gk),
            in_specs=[
                pl.BlockSpec((TM, TK), lambda i, j, k: (i, k)),
                # TODO(synk): sweep pipeline_mode=pl.Buffered(3) on this weight
                # stream when gn > 1 and the DMA is exposed.
                pl.BlockSpec((TK, TN), lambda i, j, k: (k, j)),
                pl.BlockSpec((1, TN), lambda i, j, k: (0, j)),
            ],
            out_specs=pl.BlockSpec((TM, TN), lambda i, j, k: (i, j)),
            scratch_shapes=[pltpu.VMEM((TM, TN), jnp.float32)],
        ),
        compiler_params=pltpu.CompilerParams(
            dimension_semantics=("parallel", "parallel", "arbitrary"),
            **cp_kwargs),
    )(x2d, w, b2)


def time_distributed_forward(x, w, b, *, mxu_dtype=None):
    """Pallas equivalent of TimeDistributed(nn.Linear(D_in, D_out)).forward.

    x: (T, N, D_in), (M, D_in) or (D_in,).  w: (D_in, D_out).  b: (D_out,).
    mxu_dtype: optional reduced-precision MXU operand dtype (e.g.
    jnp.bfloat16) when the accuracy budget allows; accumulation stays f32.
    """
    if x.ndim <= 2:
        if x.ndim == 1:                                 # nn.Linear 1-D input
            return _pallas_linear(x[None, :], w, b, mxu_dtype=mxu_dtype)[0]
        return _pallas_linear(x, w, b, mxu_dtype=mxu_dtype)
    t, n = x.shape[0], x.shape[1]
    x_flat = x.reshape(t * n, x.shape[2])               # contiguous().view()
    y_flat = _pallas_linear(x_flat, w, b, mxu_dtype=mxu_dtype)
    return y_flat.reshape(t, n, y_flat.shape[1])        # view(t, n, D_out)


if __name__ == "__main__":
    key = jax.random.PRNGKey(0)
    k_x, k_w, k_b, k_x2, k_w2, k_b2, k_x3 = jax.random.split(key, 7)

    # Check 1: 3-D TimeDistributed path, small shapes (single-tile grid).
    T, Nb, D_in, D_out = 8, 4, 32, 64                   # M = T*Nb = 32
    x = jax.random.normal(k_x, (T, Nb, D_in), dtype=jnp.float32)
    w = jax.random.normal(k_w, (D_in, D_out), dtype=jnp.float32) / D_in ** 0.5
    b = jax.random.normal(k_b, (D_out,), dtype=jnp.float32) * 0.01
    y = jax.block_until_ready(time_distributed_forward(x, w, b))
    y_ref = (x.reshape(T * Nb, D_in) @ w + b).reshape(T, Nb, D_out)
    assert y.shape == (T, Nb, D_out)
    assert jnp.allclose(y, y_ref, atol=2e-4, rtol=2e-4)

    # Check 2: 2-D path, non-128-multiple D_in/D_out, ragged last row tile.
    M2, D_in2, D_out2 = 650, 96, 192
    x2 = jax.random.normal(k_x2, (M2, D_in2), dtype=jnp.float32)
    w2 = jax.random.normal(k_w2, (D_in2, D_out2), dtype=jnp.float32) / D_in2 ** 0.5
    b2 = jax.random.normal(k_b2, (D_out2,), dtype=jnp.float32) * 0.01
    y2 = jax.block_until_ready(time_distributed_forward(x2, w2, b2))
    y2_ref = x2 @ w2 + b2
    assert y2.shape == (M2, D_out2)
    assert jnp.allclose(y2, y2_ref, atol=2e-4, rtol=2e-4)

    # Check 3: 1-D input (nn.Linear edge case) -> small-problem XLA fallback.
    x3 = jax.random.normal(k_x3, (D_in,), dtype=jnp.float32)
    y3 = jax.block_until_ready(time_distributed_forward(x3, w, b))
    assert y3.shape == (D_out,)
    assert jnp.allclose(y3, x3 @ w + b, atol=2e-4, rtol=2e-4)

    print("KERNEL_OK")
</pallas_src>

<mosaic_0001>
module attributes {stable_mosaic.version = 11 : i64} {
  func.func @_linear_full_k_kernel(%arg0: i32, %arg1: i32, %arg2: memref<32x32xf32, #tpu.memory_space<vmem>>, %arg3: memref<32x64xf32, #tpu.memory_space<vmem>>, %arg4: memref<1x64xf32, #tpu.memory_space<vmem>>, %arg5: memref<32x64xf32, #tpu.memory_space<vmem>>) attributes {dimension_semantics = [#tpu.dimension_semantics<parallel>, #tpu.dimension_semantics<parallel>], iteration_bounds = array<i64: 1, 1>, scalar_prefetch = 0 : i64, scratch_operands = 0 : i64, tpu.core_type = #tpu.core_type<tc>, window_params = [{transform_indices = @transform_0, window_bounds = array<i64: 32, 32>}, {transform_indices = @transform_1, window_bounds = array<i64: 32, 64>}, {transform_indices = @transform_2, window_bounds = array<i64: 1, 64>}, {transform_indices = @transform_3, window_bounds = array<i64: 32, 64>}]} {
    %c0 = arith.constant 0 : index
    %c0_0 = arith.constant 0 : index
    %0 = vector.load %arg2[%c0, %c0_0] : memref<32x32xf32, #tpu.memory_space<vmem>>, vector<32x32xf32>
    %c0_1 = arith.constant 0 : index
    %c0_2 = arith.constant 0 : index
    %1 = vector.load %arg3[%c0_1, %c0_2] : memref<32x64xf32, #tpu.memory_space<vmem>>, vector<32x64xf32>
    %cst = arith.constant dense<0.000000e+00> : vector<32x64xf32>
    %2 = tpu.matmul %0, %1, %cst {dimension_numbers = #tpu.dot_dimension_numbers<[1], [0], [0], [1], [0, 0, 1, 1], [], []>} : vector<32x32xf32>, vector<32x64xf32>, vector<32x64xf32> -> vector<32x64xf32>
    %c0_3 = arith.constant 0 : index
    %c0_4 = arith.constant 0 : index
    %3 = vector.load %arg4[%c0_3, %c0_4] : memref<1x64xf32, #tpu.memory_space<vmem>>, vector<1x64xf32>
    %4 = vector.broadcast %3 : vector<1x64xf32> to vector<32x64xf32>
    %5 = arith.addf %2, %4 : vector<32x64xf32>
    %c0_5 = arith.constant 0 : index
    %c0_6 = arith.constant 0 : index
    %6 = vector.load %arg5[%c0_5, %c0_6] : memref<32x64xf32, #tpu.memory_space<vmem>>, vector<32x64xf32>
    tpu.vector_store %arg5[%c0_5, %c0_6], %5 {strides = array<i32>} : memref<32x64xf32, #tpu.memory_space<vmem>>, vector<32x64xf32>,
    return
  }
  func.func @transform_0(%arg0: i32, %arg1: i32) -> (i32, i32) {
    %c0_i32 = arith.constant 0 : i32
    %c0_i32_0 = arith.constant 0 : i32
    return %arg0, %c0_i32 : i32, i32
  }
  func.func @transform_1(%arg0: i32, %arg1: i32) -> (i32, i32) {
    %c0_i32 = arith.constant 0 : i32
    %c0_i32_0 = arith.constant 0 : i32
    return %c0_i32, %arg1 : i32, i32
  }
  func.func @transform_2(%arg0: i32, %arg1: i32) -> (i32, i32) {
    %c0_i32 = arith.constant 0 : i32
    %c0_i32_0 = arith.constant 0 : i32
    return %c0_i32, %arg1 : i32, i32
  }
  func.func @transform_3(%arg0: i32, %arg1: i32) -> (i32, i32) {
    %c0_i32 = arith.constant 0 : i32
    return %arg0, %arg1 : i32, i32
  }
}

</mosaic_0001>

<llo_original>
// kernel: tpu_custom_call.1
$region0: #{tpu_custom_call.1}
  #allocation0 [shape = 'u32[]', space=smem, size = 0x4, offset = 0x4, fixed_abs, tag = 'smem constant byte address 0x4 - core index']
  #allocation1 [shape = 'u32[144,128]{1,0:T(1,128)}', space=vmem, size = 0x12000, scoped, tag = 'internal scratch']
  %s0 = inlined_call_operand.hbm [shape: f32[32,32], index: 0, kind: input, shape index: {}]
  %s1 = inlined_call_operand.hbm [shape: f32[32,64], index: 1, kind: input, shape index: {}]
  %s2 = inlined_call_operand.vmem [shape: f32[1,64], index: 2, kind: input, shape index: {}]
  %s3 = inlined_call_operand.hbm [shape: f32[32,64], index: 3, kind: output, shape index: {}]
  %s4 = sld [smem:[#allocation0]]
  $region30: #{tpu_custom_call.1} parent=0
    _
  %s6 = ssub.s32 1, %s4
  %s7 = scalar_select 0, %s6, %s4
  $region1: #{tpu_custom_call.1} parent=0
    #allocation2 [shape = 'u8[16384]{0}', space=vmem, size = 0x4000, scoped, tag = 'input window, operand 0, single buffered']
    #allocation3 [shape = 's32[1]{0}', space=sflag, size = 0x4, scoped, tag = 'scoped memory for tpu_custom_call.1']
    #allocation4 [shape = 's32[1]{0}', space=sflag, size = 0x4, scoped, tag = 'scoped memory for tpu_custom_call.1']
    #allocation5 [shape = 'u8[16384]{0}', space=vmem, size = 0x4000, scoped, tag = 'input window, operand 1, single buffered']
    #allocation6 [shape = 's32[1]{0}', space=sflag, size = 0x4, scoped, tag = 'scoped memory for tpu_custom_call.1']
    #allocation7 [shape = 'u8[16384]{0}', space=vmem, size = 0x4000, scoped, tag = 'output window, operand 0, single buffered']
    %8 = vsyncpa [#allocation3], 0
    %9 = vsyncpa [#allocation6], 0
    %10 = vsyncpa [#allocation4], 0
    // Predicated region
    $region2: #{tpu_custom_call.1} parent=1 // pred_check
      _
    $region3: #{tpu_custom_call.1} parent=1 // pred_check_branch
      %12 = sbr.rel (0) target = $region5
    $region4: #{tpu_custom_call.1} parent=1 // pred_region
      %s14 = ssub.s32 512, 512
      %15 = vsyncadd [#allocation3], %s14
      %s16 = sshll.u32 [#allocation2], 4
      %s17 = int_to_ptr.vmem [resolvable:$true] %s16
      %22 = dma.hbm_to_vmem [thread:$0]  %s0, 512, %s17, [#allocation3], 128, 128, 8
    $region5: #{tpu_custom_call.1} parent=1 // pred_fallthru
      _
    // Predicated region
    $region6: #{tpu_custom_call.1} parent=1 // pred_check
      _
    $region7: #{tpu_custom_call.1} parent=1 // pred_check_branch
      %24 = sbr.rel (0) target = $region9
    $region8: #{tpu_custom_call.1} parent=1 // pred_region
      %s26 = ssub.s32 512, 512
      %27 = vsyncadd [#allocation6], %s26
      %s28 = sshll.u32 [#allocation5], 4
      %s29 = int_to_ptr.vmem [resolvable:$true] %s28
      %34 = dma.hbm_to_vmem [thread:$0]  %s1, 512, %s29, [#allocation6], 128, 128, 8
    $region9: #{tpu_custom_call.1} parent=1 // pred_fallthru
      _
    // Predicated region
    $region10: #{tpu_custom_call.1} parent=1 // pred_check
      _
    $region11: #{tpu_custom_call.1} parent=1 // pred_check_branch
      %36 = sbr.rel (0) target = $region13
    $region12: #{tpu_custom_call.1} parent=1 // pred_region
      _
    $region13: #{tpu_custom_call.1} parent=1 // pred_fallthru
      _
    // Predicated region
    $region14: #{tpu_custom_call.1} parent=1 // pred_check
      _
    $region15: #{tpu_custom_call.1} parent=1 // pred_check_branch
      %38 = sbr.rel (0) target = $region17
    $region16: #{tpu_custom_call.1} parent=1 // pred_region
      %39 = dma.done [#allocation3], 512
    $region17: #{tpu_custom_call.1} parent=1 // pred_fallthru
      _
    // Predicated region
    $region18: #{tpu_custom_call.1} parent=1 // pred_check
      _
    $region19: #{tpu_custom_call.1} parent=1 // pred_check_branch
      %41 = sbr.rel (0) target = $region21
    $region20: #{tpu_custom_call.1} parent=1 // pred_region
      %42 = dma.done [#allocation6], 512
    $region21: #{tpu_custom_call.1} parent=1 // pred_fallthru
      _
    %v43 = vld [vmem:[#allocation2] sm:$0xff]
    %v44 = vld [vmem:[#allocation2 + $0x8] sm:$0xff]
    %v45 = vld [vmem:[#allocation2 + $0x10] sm:$0xff]
    %v46 = vld [vmem:[#allocation2 + $0x18] sm:$0xff]
    %v47 = vld [vmem:[#allocation5] sm:$0xff]
    %v48 = vld [vmem:[#allocation5 + $0x8] sm:$0xff]
    %v49 = vld [vmem:[#allocation5 + $0x10] sm:$0xff]
    %v50 = vld [vmem:[#allocation5 + $0x18] sm:$0xff]
    %v51 = vld [vmem:[%s2] sm:$0x1]
    %v53 = vlaneseq
    %v54 = vshrl.u32 %v53, 7
    %v55 = vsub.s32 0, %v54
    %v56 = vrot.slane %v51, %v55
    %vm58 = vcmask 261120
    %v60 = vsel %vm58, %v43, 0
    %v63 = vsel %vm58, %v44, 0
    %v66 = vsel %vm58, %v45, 0
    %v69 = vsel %vm58, %v46, 0
    %71 = vmatprep.subr.mxu0 0.0
    %72 = vmatpush1.msra.mxu0 %v47
    %73 = vmatprep.subr.mxu0 0.0
    %74 = vmatpush1.msra.mxu0 %v48
    %75 = vmatprep.subr.mxu0 0.0
    %76 = vmatpush1.msra.mxu0 %v49
    %77 = vmatprep.subr.mxu0 0.0
    %78 = vmatpush1.msra.mxu0 %v50
    %79 = vmatprep.subr.mxu0 0.0
    %80 = vmatpush1.msra.mxu0 0.0
    %81 = vmatprep.subr.mxu0 0.0
    %82 = vmatpush1.msra.mxu0 0.0
    %83 = vmatprep.subr.mxu0 0.0
    %84 = vmatpush1.msra.mxu0 0.0
    %85 = vmatprep.subr.mxu0 0.0
    %86 = vmatpush1.msra.mxu0 0.0
    %87 = vmatprep.subr.mxu0 0.0
    %88 = vmatpush1.msra.mxu0 0.0
    %89 = vmatprep.subr.mxu0 0.0
    %90 = vmatpush1.msra.mxu0 0.0
    %91 = vmatprep.subr.mxu0 0.0
    %92 = vmatpush1.msra.mxu0 0.0
    %93 = vmatprep.subr.mxu0 0.0
    %94 = vmatpush1.msra.mxu0 0.0
    %95 = vmatprep.subr.mxu0 0.0
    %96 = vmatpush1.msra.mxu0 0.0
    %97 = vmatprep.subr.mxu0 0.0
    %98 = vmatpush1.msra.mxu0 0.0
    %99 = vmatprep.subr.mxu0 0.0
    %100 = vmatpush1.msra.mxu0 0.0
    %101 = vmatprep.subr.mxu0 0.0
    %102 = vmatpush1.msra.mxu0 0.0
    %103 = vmatprep.subr.mxu0 0.0
    %104 = vmatpush1.msra.mxu0 0.0
    %105 = vmatprep.subr.mxu0 0.0
    %106 = vmatpush1.msra.mxu0 0.0
    %107 = vmatprep.subr.mxu0 0.0
    %108 = vmatpush1.msra.mxu0 0.0
    %109 = vmatprep.subr.mxu0 0.0
    %110 = vmatpush1.msra.mxu0 0.0
    %111 = vmatprep.subr.mxu0 0.0
    %112 = vmatpush1.msra.mxu0 0.0
    %113 = vmatprep.subr.mxu0 0.0
    %114 = vmatpush1.msra.mxu0 0.0
    %115 = vmatprep.subr.mxu0 0.0
    %116 = vmatpush1.msra.mxu0 0.0
    %117 = vmatprep.subr.mxu0 0.0
    %118 = vmatpush1.msra.mxu0 0.0
    %119 = vmatprep.subr.mxu0 0.0
    %120 = vmatpush1.msra.mxu0 0.0
    %121 = vmatprep.subr.mxu0 0.0
    %122 = vmatpush1.msra.mxu0 0.0
    %123 = vmatprep.subr.mxu0 0.0
    %124 = vmatpush1.msra.mxu0 0.0
    %125 = vmatprep.subr.mxu0 0.0
    %126 = vmatpush1.msra.mxu0 0.0
    %127 = vmatprep.subr.mxu0 0.0
    %128 = vmatpush1.msra.mxu0 0.0
    %129 = vmatprep.subr.mxu0 0.0
    %130 = vmatpush1.msra.mxu0 0.0
    %131 = vmatprep.subr.mxu0 0.0
    %132 = vmatpush1.msra.mxu0 0.0
    %133 = vmatprep.subr.mxu0 0.0
    %134 = vmatpush1.msra.mxu0 0.0
    %135 = vmatprep.mubr.f32.mxu0 0.0
    %136 = vmatmul.mubr.f32.gmra.mrb[0].mxu0 %v60
    %v137 = vpop.f32.mrb[0].mxu0
    %v138 = vadd.f32 %v56, %v137
    %v139 = vpop.f32.mrb[0].mxu0
    %140 = vmatprep.mubr.f32.mxu0 0.0
    %141 = vmatmul.mubr.f32.gmra.mrb[0].mxu0 %v63
    %v142 = vpop.f32.mrb[0].mxu0
    %v143 = vadd.f32 %v56, %v142
    %v144 = vpop.f32.mrb[0].mxu0
    %145 = vmatprep.mubr.f32.mxu0 0.0
    %146 = vmatmul.mubr.f32.gmra.mrb[0].mxu0 %v66
    %v147 = vpop.f32.mrb[0].mxu0
    %v148 = vadd.f32 %v56, %v147
    %v149 = vpop.f32.mrb[0].mxu0
    %150 = vmatprep.mubr.f32.mxu0 0.0
    %151 = vmatmul.mubr.f32.gmra.mrb[0].mxu0 %v69
    %v152 = vpop.f32.mrb[0].mxu0
    %v153 = vadd.f32 %v56, %v152
    %v154 = vpop.f32.mrb[0].mxu0
    %155 = vdwg.mxu0
    %vm156 = vcmask 523264
    %157 = vst.msk [vmem:[#allocation7] sm:$0xff] %vm156, %v138
    %158 = vst.msk [vmem:[#allocation7 + $0x8] sm:$0xff] %vm156, %v143
    %159 = vst.msk [vmem:[#allocation7 + $0x10] sm:$0xff] %vm156, %v148
    %160 = vst.msk [vmem:[#allocation7 + $0x18] sm:$0xff] %vm156, %v153
    // Predicated region
    $region22: #{tpu_custom_call.1} parent=1 // pred_check
      _
    $region23: #{tpu_custom_call.1} parent=1 // pred_check_branch
      %162 = sbr.rel (0) target = $region25
    $region24: #{tpu_custom_call.1} parent=1 // pred_region
      %s164 = ssub.s32 512, 512
      %165 = vsyncadd [#allocation4], %s164
      %s166 = sshll.u32 [#allocation7], 4
      %s167 = int_to_ptr.vmem [resolvable:$true] %s166
      %172 = dma.vmem_to_hbm [thread:$0]  %s167, 512, %s3, [#allocation4], 128, 128, 8
    $region25: #{tpu_custom_call.1} parent=1 // pred_fallthru
      _
    // Predicated region
    $region26: #{tpu_custom_call.1} parent=1 // pred_check
      _
    $region27: #{tpu_custom_call.1} parent=1 // pred_check_branch
      %174 = sbr.rel (0) target = $region29
    $region28: #{tpu_custom_call.1} parent=1 // pred_region
      %175 = dma.done [#allocation4], 512
    $region29: #{tpu_custom_call.1} parent=1 // pred_fallthru
      _
    %176 = vsyncpa [#allocation3], 1
    %177 = vsyncpa [#allocation6], 1
    %178 = vsyncpa [#allocation4], 1

</llo_original>
